<compile_context>
chip_gen: v6e
topology: v6e:2x2x1
jax: 0.10.0
libtpu: 0.0.40
codegen_flags: <defaults>
</compile_context>

<pallas_src>
import functools

import jax
import jax.numpy as jnp
from jax import lax
from jax.experimental import pallas as pl
from jax.experimental.pallas import tpu as pltpu

_LANES = 128
_SUBLANES = 8
_MAX_TILE_ROWS = 4096          # 4096 x 128 f32 tile = 2 MiB per pipeline buffer
_PALLAS_MIN_ELEMS = 64 * 1024  # below this, plain JAX (launch overhead dominates)
_CLIP_LO = 0.0001
_CLIP_HI = 0.15


def _cdiv(a: int, b: int) -> int:
    return -(-a // b)


def _round_up(a: int, b: int) -> int:
    return _cdiv(a, b) * b


def _default_num_partitions() -> int:
    """One partition per TensorCore: 2 on v7x (2 TCs/chip), 1 on v5e/v6e."""
    try:
        kind = jax.devices()[0].device_kind.lower()
    except Exception:  # pragma: no cover - defensive
        return 1
    return 2 if "v7" in kind else 1


def _partial_sum_kernel(x_ref, o_ref, *, rows, tile_rows, tiles_per_part):
    """Accumulates lane-dense partial sums of x into a per-partition (8,128) block.

    x_ref: (tile_rows, 128) VMEM tile of the flattened input (native dtype)
    o_ref: (1, 8, 128)      VMEM f32 output block (resident across the inner axis)
    """
    c = pl.program_id(0)   # partition ("parallel" axis, sharded across TCs on v7x)
    i = pl.program_id(1)   # tile within the partition ("arbitrary" reduction axis)

    @pl.when(i == 0)
    def _init():
        o_ref[...] = jnp.zeros_like(o_ref)

    base_row = (c * tiles_per_part + i) * tile_rows
    x = x_ref[...].astype(jnp.float32)

    # Full interior tile: plain VPU adds, no masking, no XLU.
    @pl.when(base_row + tile_rows <= rows)
    def _full():
        o_ref[...] += jnp.sum(
            x.reshape(tile_rows // _SUBLANES, _SUBLANES, _LANES),
            axis=0, keepdims=True)

    # Boundary tile (rows % tile_rows remainder) or phantom tile (clamped index_map
    # when the tile count doesn't divide evenly across partitions): mask OOB rows.
    @pl.when(base_row + tile_rows > rows)
    def _masked():
        row_ids = lax.broadcasted_iota(jnp.int32, (tile_rows, _LANES), 0)
        xm = jnp.where(row_ids < rows - base_row, x, 0.0)
        o_ref[...] += jnp.sum(
            xm.reshape(tile_rows // _SUBLANES, _SUBLANES, _LANES),
            axis=0, keepdims=True)


def _pallas_partial_sums(x2d: jax.Array, tile_rows: int, num_partitions: int) -> jax.Array:
    """Returns (num_partitions, 8, 128) f32 partial sums of x2d (a (rows, 128) slab)."""
    rows = x2d.shape[0]
    total_tiles = _cdiv(rows, tile_rows)
    num_partitions = max(1, min(num_partitions, total_tiles))
    tiles_per_part = _cdiv(total_tiles, num_partitions)

    kernel = functools.partial(
        _partial_sum_kernel, rows=rows, tile_rows=tile_rows,
        tiles_per_part=tiles_per_part)

    def x_index_map(c, i):
        # Clamp phantom tiles (last partition may have fewer real tiles) onto the last
        # valid block; the in-kernel row mask zeroes their contribution.
        return (jnp.minimum(c * tiles_per_part + i, total_tiles - 1), 0)

    return pl.pallas_call(
        kernel,
        out_shape=jax.ShapeDtypeStruct((num_partitions, _SUBLANES, _LANES), jnp.float32),
        grid=(num_partitions, tiles_per_part),
        in_specs=[pl.BlockSpec((tile_rows, _LANES), x_index_map)],
        out_specs=pl.BlockSpec((1, _SUBLANES, _LANES), lambda c, i: (c, 0, 0)),
        compiler_params=pltpu.CompilerParams(
            dimension_semantics=("parallel", "arbitrary"),
            vmem_limit_bytes=32 * 1024 * 1024,
        ),
    )(x2d)


def log_alpha_forward(x: jax.Array, weight: jax.Array, *, num_partitions=None) -> jax.Array:
    """x: any-shape float array (PyTorch layout (N, 1)); weight: (1, 1).

    Returns clip(mean(x * w), 1e-4, 0.15) as an f32 scalar.
    """
    n = int(x.size)
    w = weight.reshape(()).astype(jnp.float32)

    if n < _PALLAS_MIN_ELEMS:
        # Small-N fast path (production case is N ~ 8): let XLA fuse it; a Pallas
        # launch would be pure overhead.  (n == 0 -> nan, matching torch.mean.)
        return jnp.clip(jnp.mean(x.astype(jnp.float32)) * w, _CLIP_LO, _CLIP_HI)

    if num_partitions is None:
        num_partitions = _default_num_partitions()

    flat = x.reshape(-1)
    rem = n % _LANES
    if rem:
        # TODO(synk): this pad is a full HBM copy; only hit when a large N is not a
        # multiple of 128 (rare).  Zero padding does not perturb the sum; the mean
        # below divides by the true element count n.
        flat = jnp.pad(flat, (0, _LANES - rem))
    x2d = flat.reshape(-1, _LANES)   # free reshape when rem == 0 (no HBM copy)
    rows = x2d.shape[0]

    # Dtype-native sublane rounding for the tile: 8 rows f32, 16 bf16, 32 int8/fp8.
    itemsize = int(jnp.dtype(x2d.dtype).itemsize)
    sublane_mult = max(_SUBLANES, 32 // max(itemsize, 1))
    tile_rows = min(_MAX_TILE_ROWS, _round_up(rows, sublane_mult))

    partials = _pallas_partial_sums(x2d, tile_rows, num_partitions)

    # Final cross-sublane/cross-lane reduce + weight + 1/n + clip: tiny scalar epilogue
    # (runs once on num_partitions * 1024 floats).
    mean_val = jnp.sum(partials) * w * jnp.float32(1.0 / n)
    return jnp.clip(mean_val, _CLIP_LO, _CLIP_HI)


class LogAlpha:
    """Deterministic JAX/Pallas port of marlis LogAlpha."""

    def __init__(self, temperature: float = 0.05, dtype=jnp.bfloat16):
        # nn.Linear(1, 1, bias=False).weight has shape (1, 1); the PyTorch module
        # leaves it in float32 (its dtype arg is never applied to the Linear).
        del dtype
        self.weight = jnp.full((1, 1), temperature, dtype=jnp.float32)

    def __call__(self, x: jax.Array) -> jax.Array:
        return log_alpha_forward(x, self.weight)


if __name__ == "__main__":
    key = jax.random.PRNGKey(0)
    module = LogAlpha(temperature=0.05)

    def ref_fn(x):
        return jnp.clip(jnp.mean(x.astype(jnp.float32)) * jnp.float32(0.05),
                        _CLIP_LO, _CLIP_HI)

    # 1) Production-style tiny input (batch=8, in_features=1), bf16: plain-JAX path.
    x_small = jax.random.normal(key, (8, 1), dtype=jnp.float32).astype(jnp.bfloat16)
    out_small = jax.block_until_ready(module(x_small))
    assert jnp.allclose(out_small, ref_fn(x_small), atol=1e-6, rtol=1e-5), (
        out_small, ref_fn(x_small))

    k1, k2 = jax.random.split(key)

    # 2) Large f32 with N % 128 != 0: exercises the rare pad-fallback + row masking.
    x_a = jax.random.normal(k1, (70000, 1), dtype=jnp.float32) + 1.0
    ref_a = ref_fn(x_a)
    out_a = jax.block_until_ready(log_alpha_forward(x_a, module.weight, num_partitions=1))
    assert jnp.allclose(out_a, ref_a, atol=1e-6, rtol=1e-4), (out_a, ref_a)
    out_auto = jax.block_until_ready(module(x_a))   # auto partition count for this chip
    assert jnp.allclose(out_auto, ref_a, atol=1e-6, rtol=1e-4), (out_auto, ref_a)

    # 3) Large bf16 with N % 128 == 0 (copy-free path), rows % tile_rows != 0
    #    (boundary masking) and, with 2 partitions, a phantom clamped tile — i.e.
    #    the v7x two-TensorCore code path, validated regardless of the local chip.
    n_b = 9000 * 128
    x_b = (jax.random.normal(k2, (n_b, 1), dtype=jnp.float32) + 1.0).astype(jnp.bfloat16)
    ref_b = ref_fn(x_b)
    for parts in (1, 2):
        out_b = jax.block_until_ready(
            log_alpha_forward(x_b, module.weight, num_partitions=parts))
        assert jnp.allclose(out_b, ref_b, atol=1e-5, rtol=2e-3), (parts, out_b, ref_b)

    print("KERNEL_OK")
</pallas_src>

<mosaic_0001>
module attributes {stable_mosaic.version = 11 : i64} {
  func.func @_partial_sum_kernel(%arg0: i32, %arg1: i32, %arg2: memref<552x128xf32, #tpu.memory_space<vmem>>, %arg3: memref<1x8x128xf32, #tpu.memory_space<vmem>>) attributes {dimension_semantics = [#tpu.dimension_semantics<parallel>, #tpu.dimension_semantics<arbitrary>], iteration_bounds = array<i64: 1, 1>, scalar_prefetch = 0 : i64, scratch_operands = 0 : i64, tpu.core_type = #tpu.core_type<tc>, window_params = [{transform_indices = @transform_0, window_bounds = array<i64: 552, 128>}, {transform_indices = @transform_1, window_bounds = array<i64: 1, 8, 128>}]} {
    %c0_i32 = arith.constant 0 : i32
    %0 = arith.cmpi eq, %arg1, %c0_i32 : i32
    %1 = arith.extui %0 : i1 to i32
    %c0_i32_0 = arith.constant 0 : i32
    %2 = arith.cmpi ne, %1, %c0_i32_0 : i32
    scf.if %2 {
      %cst = arith.constant 0.000000e+00 : f32
      %15 = vector.broadcast %cst : f32 to vector<1x8x128xf32>
      %c0_7 = arith.constant 0 : index
      %c0_8 = arith.constant 0 : index
      %c0_9 = arith.constant 0 : index
      %16 = vector.load %arg3[%c0_7, %c0_8, %c0_9] : memref<1x8x128xf32, #tpu.memory_space<vmem>>, vector<1x8x128xf32>
      tpu.vector_store %arg3[%c0_7, %c0_8, %c0_9], %15 {strides = array<i32>} : memref<1x8x128xf32, #tpu.memory_space<vmem>>, vector<1x8x128xf32>,
    } else {
    }
    %c1_i32 = arith.constant 1 : i32
    %3 = arith.muli %arg0, %c1_i32 : i32
    %4 = arith.addi %3, %arg1 : i32
    %c552_i32 = arith.constant 552 : i32
    %5 = arith.muli %4, %c552_i32 : i32
    %c0 = arith.constant 0 : index
    %c0_1 = arith.constant 0 : index
    %6 = vector.load %arg2[%c0, %c0_1] : memref<552x128xf32, #tpu.memory_space<vmem>>, vector<552x128xf32>
    %c552_i32_2 = arith.constant 552 : i32
    %7 = arith.addi %5, %c552_i32_2 : i32
    %c547_i32 = arith.constant 547 : i32
    %8 = arith.cmpi sle, %7, %c547_i32 : i32
    %9 = arith.extui %8 : i1 to i32
    %c0_i32_3 = arith.constant 0 : i32
    %10 = arith.cmpi ne, %9, %c0_i32_3 : i32
    scf.if %10 {
      %c0_7 = arith.constant 0 : index
      %c0_8 = arith.constant 0 : index
      %c0_9 = arith.constant 0 : index
      %15 = vector.load %arg3[%c0_7, %c0_8, %c0_9] : memref<1x8x128xf32, #tpu.memory_space<vmem>>, vector<1x8x128xf32>
      %16 = vector.shape_cast %6 : vector<552x128xf32> to vector<69x8x128xf32>
      %cst = arith.constant dense<0.000000e+00> : vector<8x128xf32>
      %17 = vector.multi_reduction <add>, %16, %cst [0] : vector<69x8x128xf32> to vector<8x128xf32>
      %18 = vector.shape_cast %17 : vector<8x128xf32> to vector<1x8x128xf32>
      %19 = arith.addf %15, %18 : vector<1x8x128xf32>
      %c0_10 = arith.constant 0 : index
      %c0_11 = arith.constant 0 : index
      %c0_12 = arith.constant 0 : index
      %20 = vector.load %arg3[%c0_10, %c0_11, %c0_12] : memref<1x8x128xf32, #tpu.memory_space<vmem>>, vector<1x8x128xf32>
      tpu.vector_store %arg3[%c0_10, %c0_11, %c0_12], %19 {strides = array<i32>} : memref<1x8x128xf32, #tpu.memory_space<vmem>>, vector<1x8x128xf32>,
    } else {
    }
    %c552_i32_4 = arith.constant 552 : i32
    %11 = arith.addi %5, %c552_i32_4 : i32
    %c547_i32_5 = arith.constant 547 : i32
    %12 = arith.cmpi sgt, %11, %c547_i32_5 : i32
    %13 = arith.extui %12 : i1 to i32
    %c0_i32_6 = arith.constant 0 : i32
    %14 = arith.cmpi ne, %13, %c0_i32_6 : i32
    scf.if %14 {
      %15 = tpu.iota {dimensions = array<i32: 0>} : vector<552x128xi32>
      %c547_i32_7 = arith.constant 547 : i32
      %16 = arith.subi %c547_i32_7, %5 : i32
      %17 = vector.broadcast %16 : i32 to vector<552x128xi32>
      %18 = arith.cmpi slt, %15, %17 : vector<552x128xi32>
      %cst = arith.constant 0.000000e+00 : f32
      %19 = vector.broadcast %cst : f32 to vector<552x128xf32>
      %20 = arith.select %18, %6, %19 : vector<552x128xi1>, vector<552x128xf32>
      %c0_8 = arith.constant 0 : index
      %c0_9 = arith.constant 0 : index
      %c0_10 = arith.constant 0 : index
      %21 = vector.load %arg3[%c0_8, %c0_9, %c0_10] : memref<1x8x128xf32, #tpu.memory_space<vmem>>, vector<1x8x128xf32>
      %22 = vector.shape_cast %20 : vector<552x128xf32> to vector<69x8x128xf32>
      %cst_11 = arith.constant dense<0.000000e+00> : vector<8x128xf32>
      %23 = vector.multi_reduction <add>, %22, %cst_11 [0] : vector<69x8x128xf32> to vector<8x128xf32>
      %24 = vector.shape_cast %23 : vector<8x128xf32> to vector<1x8x128xf32>
      %25 = arith.addf %21, %24 : vector<1x8x128xf32>
      %c0_12 = arith.constant 0 : index
      %c0_13 = arith.constant 0 : index
      %c0_14 = arith.constant 0 : index
      %26 = vector.load %arg3[%c0_12, %c0_13, %c0_14] : memref<1x8x128xf32, #tpu.memory_space<vmem>>, vector<1x8x128xf32>
      tpu.vector_store %arg3[%c0_12, %c0_13, %c0_14], %25 {strides = array<i32>} : memref<1x8x128xf32, #tpu.memory_space<vmem>>, vector<1x8x128xf32>,
    } else {
    }
    return
  }
  func.func @transform_0(%arg0: i32, %arg1: i32) -> (i32, i32) {
    %c1_i32 = arith.constant 1 : i32
    %0 = arith.muli %arg0, %c1_i32 : i32
    %1 = arith.addi %0, %arg1 : i32
    %c0_i32 = arith.constant 0 : i32
    %2 = arith.minsi %1, %c0_i32 : i32
    %c0_i32_0 = arith.constant 0 : i32
    %c0_i32_1 = arith.constant 0 : i32
    return %2, %c0_i32_0 : i32, i32
  }
  func.func @transform_1(%arg0: i32, %arg1: i32) -> (i32, i32, i32) {
    %c0_i32 = arith.constant 0 : i32
    %c0_i32_0 = arith.constant 0 : i32
    %c0_i32_1 = arith.constant 0 : i32
    return %arg0, %c0_i32, %c0_i32_0 : i32, i32, i32
  }
}

</mosaic_0001>

<llo_original>
// kernel: tpu_custom_call.1
$region0: #{tpu_custom_call.1}
  #allocation0 [shape = 'u32[]', space=smem, size = 0x4, offset = 0x4, fixed_abs, tag = 'smem constant byte address 0x4 - core index']
  #allocation1 [shape = 'u32[144,128]{1,0:T(1,128)}', space=vmem, size = 0x12000, scoped, tag = 'internal scratch']
  %s0 = inlined_call_operand.hbm [shape: f32[547,128], index: 0, kind: input, shape index: {}]
  %s1 = inlined_call_operand.hbm [shape: f32[1,8,128], index: 1, kind: output, shape index: {}]
  %s2 = sld [smem:[#allocation0]]
  $region30: #{tpu_custom_call.1} parent=0
    _
  %s4 = ssub.s32 1, %s2
  %s5 = scalar_select 0, %s4, %s2
  $region1: #{tpu_custom_call.1} parent=0
    #allocation2 [shape = 'u8[282624]{0}', space=vmem, size = 0x45000, scoped, tag = 'input window, operand 0, single buffered']
    #allocation3 [shape = 's32[1]{0}', space=sflag, size = 0x4, scoped, tag = 'scoped memory for tpu_custom_call.1']
    #allocation4 [shape = 's32[1]{0}', space=sflag, size = 0x4, scoped, tag = 'scoped memory for tpu_custom_call.1']
    #allocation5 [shape = 'u8[4096]{0}', space=vmem, size = 0x1000, scoped, tag = 'output window, operand 0, single buffered']
    %6 = vsyncpa [#allocation3], 0
    %7 = vsyncpa [#allocation4], 0
    // Predicated region
    $region2: #{tpu_custom_call.1} parent=1 // pred_check
      _
    $region3: #{tpu_custom_call.1} parent=1 // pred_check_branch
      %9 = sbr.rel (0) target = $region5
    $region4: #{tpu_custom_call.1} parent=1 // pred_region
      %s10 = sadd.s32 0, 0
      %p11 = scmp.lt.s32.totalorder %s10, 0
      %s12 = scalar_select %p11, %s10, 0
      %s13 = smul.u32 69, %s12
      %s15 = ssub.s32 8832, 8832
      %16 = vsyncadd [#allocation3], %s15
      %s17 = smul.addr %s13, 128
      %s18 = scalar_lea.hbm %s0, %s17
      %s19 = sshll.u32 [#allocation2], 4
      %s20 = int_to_ptr.vmem [resolvable:$true] %s19
      %25 = dma.hbm_to_vmem [thread:$0]  %s18, 8832, %s20, [#allocation3], 128, 128, 8
    $region5: #{tpu_custom_call.1} parent=1 // pred_fallthru
      _
    // Predicated region
    $region6: #{tpu_custom_call.1} parent=1 // pred_check
      _
    $region7: #{tpu_custom_call.1} parent=1 // pred_check_branch
      %27 = sbr.rel (0) target = $region9
    $region8: #{tpu_custom_call.1} parent=1 // pred_region
      %28 = dma.done [#allocation3], 8832
    $region9: #{tpu_custom_call.1} parent=1 // pred_fallthru
      _
    %s29 = sadd.s32 0, 0
    %p30 = scmp.lt.s32.totalorder %s29, 0
    %s31 = scalar_select %p30, %s29, 0
    %s32 = smul.u32 69, %s31
    %p33 = scmp.eq.s32.totalorder 0, 0
    // Predicated region
    $region10: #{tpu_custom_call.1} parent=1 // pred_check
      %p34 = pneg %p33
    $region11: #{tpu_custom_call.1} parent=1 // pred_check_branch
      %36 = sbr.rel (%p34) target = $region13
    $region12: #{tpu_custom_call.1} parent=1 // pred_region
      %37 = vst [vmem:[#allocation5] sm:$0xff] 0.0
    $region13: #{tpu_custom_call.1} parent=1 // pred_fallthru
      _
    %s38 = sadd.s32 0, 0
    %s39 = smul.u32 %s38, 552
    %v40 = vld [vmem:[#allocation2] sm:$0xff]
    %v41 = vld [vmem:[#allocation2 + $0x8] sm:$0xff]
    %v42 = vld [vmem:[#allocation2 + $0x10] sm:$0xff]
    %v43 = vld [vmem:[#allocation2 + $0x18] sm:$0xff]
    %v44 = vld [vmem:[#allocation2 + $0x20] sm:$0xff]
    %v45 = vld [vmem:[#allocation2 + $0x28] sm:$0xff]
    %v46 = vld [vmem:[#allocation2 + $0x30] sm:$0xff]
    %v47 = vld [vmem:[#allocation2 + $0x38] sm:$0xff]
    %v48 = vld [vmem:[#allocation2 + $0x40] sm:$0xff]
    %v49 = vld [vmem:[#allocation2 + $0x48] sm:$0xff]
    %v50 = vld [vmem:[#allocation2 + $0x50] sm:$0xff]
    %v51 = vld [vmem:[#allocation2 + $0x58] sm:$0xff]
    %v52 = vld [vmem:[#allocation2 + $0x60] sm:$0xff]
    %v53 = vld [vmem:[#allocation2 + $0x68] sm:$0xff]
    %v54 = vld [vmem:[#allocation2 + $0x70] sm:$0xff]
    %v55 = vld [vmem:[#allocation2 + $0x78] sm:$0xff]
    %v56 = vld [vmem:[#allocation2 + $0x80] sm:$0xff]
    %v57 = vld [vmem:[#allocation2 + $0x88] sm:$0xff]
    %v58 = vld [vmem:[#allocation2 + $0x90] sm:$0xff]
    %v59 = vld [vmem:[#allocation2 + $0x98] sm:$0xff]
    %v60 = vld [vmem:[#allocation2 + $0xa0] sm:$0xff]
    %v61 = vld [vmem:[#allocation2 + $0xa8] sm:$0xff]
    %v62 = vld [vmem:[#allocation2 + $0xb0] sm:$0xff]
    %v63 = vld [vmem:[#allocation2 + $0xb8] sm:$0xff]
    %v64 = vld [vmem:[#allocation2 + $0xc0] sm:$0xff]
    %v65 = vld [vmem:[#allocation2 + $0xc8] sm:$0xff]
    %v66 = vld [vmem:[#allocation2 + $0xd0] sm:$0xff]
    %v67 = vld [vmem:[#allocation2 + $0xd8] sm:$0xff]
    %v68 = vld [vmem:[#allocation2 + $0xe0] sm:$0xff]
    %v69 = vld [vmem:[#allocation2 + $0xe8] sm:$0xff]
    %v70 = vld [vmem:[#allocation2 + $0xf0] sm:$0xff]
    %v71 = vld [vmem:[#allocation2 + $0xf8] sm:$0xff]
    %v72 = vld [vmem:[#allocation2 + $0x100] sm:$0xff]
    %v73 = vld [vmem:[#allocation2 + $0x108] sm:$0xff]
    %v74 = vld [vmem:[#allocation2 + $0x110] sm:$0xff]
    %v75 = vld [vmem:[#allocation2 + $0x118] sm:$0xff]
    %v76 = vld [vmem:[#allocation2 + $0x120] sm:$0xff]
    %v77 = vld [vmem:[#allocation2 + $0x128] sm:$0xff]
    %v78 = vld [vmem:[#allocation2 + $0x130] sm:$0xff]
    %v79 = vld [vmem:[#allocation2 + $0x138] sm:$0xff]
    %v80 = vld [vmem:[#allocation2 + $0x140] sm:$0xff]
    %v81 = vld [vmem:[#allocation2 + $0x148] sm:$0xff]
    %v82 = vld [vmem:[#allocation2 + $0x150] sm:$0xff]
    %v83 = vld [vmem:[#allocation2 + $0x158] sm:$0xff]
    %v84 = vld [vmem:[#allocation2 + $0x160] sm:$0xff]
    %v85 = vld [vmem:[#allocation2 + $0x168] sm:$0xff]
    %v86 = vld [vmem:[#allocation2 + $0x170] sm:$0xff]
    %v87 = vld [vmem:[#allocation2 + $0x178] sm:$0xff]
    %v88 = vld [vmem:[#allocation2 + $0x180] sm:$0xff]
    %v89 = vld [vmem:[#allocation2 + $0x188] sm:$0xff]
    %v90 = vld [vmem:[#allocation2 + $0x190] sm:$0xff]
    %v91 = vld [vmem:[#allocation2 + $0x198] sm:$0xff]
    %v92 = vld [vmem:[#allocation2 + $0x1a0] sm:$0xff]
    %v93 = vld [vmem:[#allocation2 + $0x1a8] sm:$0xff]
    %v94 = vld [vmem:[#allocation2 + $0x1b0] sm:$0xff]
    %v95 = vld [vmem:[#allocation2 + $0x1b8] sm:$0xff]
    %v96 = vld [vmem:[#allocation2 + $0x1c0] sm:$0xff]
    %v97 = vld [vmem:[#allocation2 + $0x1c8] sm:$0xff]
    %v98 = vld [vmem:[#allocation2 + $0x1d0] sm:$0xff]
    %v99 = vld [vmem:[#allocation2 + $0x1d8] sm:$0xff]
    %v100 = vld [vmem:[#allocation2 + $0x1e0] sm:$0xff]
    %v101 = vld [vmem:[#allocation2 + $0x1e8] sm:$0xff]
    %v102 = vld [vmem:[#allocation2 + $0x1f0] sm:$0xff]
    %v103 = vld [vmem:[#allocation2 + $0x1f8] sm:$0xff]
    %v104 = vld [vmem:[#allocation2 + $0x200] sm:$0xff]
    %v105 = vld [vmem:[#allocation2 + $0x208] sm:$0xff]
    %v106 = vld [vmem:[#allocation2 + $0x210] sm:$0xff]
    %v107 = vld [vmem:[#allocation2 + $0x218] sm:$0xff]
    %v108 = vld [vmem:[#allocation2 + $0x220] sm:$0xff]
    %s109 = sadd.s32 %s39, 552
    %p110 = scmp.le.s32.totalorder %s109, 547
    // Predicated region
    $region14: #{tpu_custom_call.1} parent=1 // pred_check
      %p111 = pneg %p110
    $region15: #{tpu_custom_call.1} parent=1 // pred_check_branch
      %113 = sbr.rel (%p111) target = $region17
    $region16: #{tpu_custom_call.1} parent=1 // pred_region
      %v114 = vld [vmem:[#allocation5] sm:$0xff]
      %v115 = vadd.f32 %v40, %v41
      %v116 = vadd.f32 %v115, %v42
      %v117 = vadd.f32 %v116, %v43
      %v118 = vadd.f32 %v117, %v44
      %v119 = vadd.f32 %v118, %v45
      %v120 = vadd.f32 %v119, %v46
      %v121 = vadd.f32 %v120, %v47
      %v122 = vadd.f32 %v121, %v48
      %v123 = vadd.f32 %v122, %v49
      %v124 = vadd.f32 %v123, %v50
      %v125 = vadd.f32 %v124, %v51
      %v126 = vadd.f32 %v125, %v52
      %v127 = vadd.f32 %v126, %v53
      %v128 = vadd.f32 %v127, %v54
      %v129 = vadd.f32 %v128, %v55
      %v130 = vadd.f32 %v129, %v56
      %v131 = vadd.f32 %v130, %v57
      %v132 = vadd.f32 %v131, %v58
      %v133 = vadd.f32 %v132, %v59
      %v134 = vadd.f32 %v133, %v60
      %v135 = vadd.f32 %v134, %v61
      %v136 = vadd.f32 %v135, %v62
      %v137 = vadd.f32 %v136, %v63
      %v138 = vadd.f32 %v137, %v64
      %v139 = vadd.f32 %v138, %v65
      %v140 = vadd.f32 %v139, %v66
      %v141 = vadd.f32 %v140, %v67
      %v142 = vadd.f32 %v141, %v68
      %v143 = vadd.f32 %v142, %v69
      %v144 = vadd.f32 %v143, %v70
      %v145 = vadd.f32 %v144, %v71
      %v146 = vadd.f32 %v145, %v72
      %v147 = vadd.f32 %v146, %v73
      %v148 = vadd.f32 %v147, %v74
      %v149 = vadd.f32 %v148, %v75
      %v150 = vadd.f32 %v149, %v76
      %v151 = vadd.f32 %v150, %v77
      %v152 = vadd.f32 %v151, %v78
      %v153 = vadd.f32 %v152, %v79
      %v154 = vadd.f32 %v153, %v80
      %v155 = vadd.f32 %v154, %v81
      %v156 = vadd.f32 %v155, %v82
      %v157 = vadd.f32 %v156, %v83
      %v158 = vadd.f32 %v157, %v84
      %v159 = vadd.f32 %v158, %v85
      %v160 = vadd.f32 %v159, %v86
      %v161 = vadd.f32 %v160, %v87
      %v162 = vadd.f32 %v161, %v88
      %v163 = vadd.f32 %v162, %v89
      %v164 = vadd.f32 %v163, %v90
      %v165 = vadd.f32 %v164, %v91
      %v166 = vadd.f32 %v165, %v92
      %v167 = vadd.f32 %v166, %v93
      %v168 = vadd.f32 %v167, %v94
      %v169 = vadd.f32 %v168, %v95
      %v170 = vadd.f32 %v169, %v96
      %v171 = vadd.f32 %v170, %v97
      %v172 = vadd.f32 %v171, %v98
      %v173 = vadd.f32 %v172, %v99
      %v174 = vadd.f32 %v173, %v100
      %v175 = vadd.f32 %v174, %v101
      %v176 = vadd.f32 %v175, %v102
      %v177 = vadd.f32 %v176, %v103
      %v178 = vadd.f32 %v177, %v104
      %v179 = vadd.f32 %v178, %v105
      %v180 = vadd.f32 %v179, %v106
      %v181 = vadd.f32 %v180, %v107
      %v182 = vadd.f32 %v181, %v108
      %v183 = vadd.f32 %v114, %v182
      %184 = vst [vmem:[#allocation5] sm:$0xff] %v183
    $region17: #{tpu_custom_call.1} parent=1 // pred_fallthru
      _
    %p185 = scmp.gt.s32.totalorder %s109, 547
    // Predicated region
    $region18: #{tpu_custom_call.1} parent=1 // pred_check
      %p186 = pneg %p185
    $region19: #{tpu_custom_call.1} parent=1 // pred_check_branch
      %188 = sbr.rel (%p186) target = $region21
    $region20: #{tpu_custom_call.1} parent=1 // pred_region
      %v189 = vlaneseq
      %v190 = vshrl.u32 %v189, 7
      %v191 = vadd.s32 %v190, 8
      %v192 = vadd.s32 %v190, 16
      %v193 = vadd.s32 %v190, 24
      %v194 = vadd.s32 %v190, 32
      %v195 = vadd.s32 %v190, 40
      %v196 = vadd.s32 %v190, 48
      %v197 = vadd.s32 %v190, 56
      %v198 = vadd.s32 %v190, 64
      %v199 = vadd.s32 %v190, 72
      %v200 = vadd.s32 %v190, 80
      %v201 = vadd.s32 %v190, 88
      %v202 = vadd.s32 %v190, 96
      %v203 = vadd.s32 %v190, 104
      %v204 = vadd.s32 %v190, 112
      %v205 = vadd.s32 %v190, 120
      %v206 = vadd.s32 %v190, 128
      %v207 = vadd.s32 %v190, 136
      %v208 = vadd.s32 %v190, 144
      %v209 = vadd.s32 %v190, 152
      %v210 = vadd.s32 %v190, 160
      %v211 = vadd.s32 %v190, 168
      %v212 = vadd.s32 %v190, 176
      %v213 = vadd.s32 %v190, 184
      %v214 = vadd.s32 %v190, 192
      %v215 = vadd.s32 %v190, 200
      %v216 = vadd.s32 %v190, 208
      %v217 = vadd.s32 %v190, 216
      %v218 = vadd.s32 %v190, 224
      %v219 = vadd.s32 %v190, 232
      %v220 = vadd.s32 %v190, 240
      %v221 = vadd.s32 %v190, 248
      %v222 = vadd.s32 %v190, 256
      %v223 = vadd.s32 %v190, 264
      %v224 = vadd.s32 %v190, 272
      %v225 = vadd.s32 %v190, 280
      %v226 = vadd.s32 %v190, 288
      %v227 = vadd.s32 %v190, 296
      %v228 = vadd.s32 %v190, 304
      %v229 = vadd.s32 %v190, 312
      %v230 = vadd.s32 %v190, 320
      %v231 = vadd.s32 %v190, 328
      %v232 = vadd.s32 %v190, 336
      %v233 = vadd.s32 %v190, 344
      %v234 = vadd.s32 %v190, 352
      %v235 = vadd.s32 %v190, 360
      %v236 = vadd.s32 %v190, 368
      %v237 = vadd.s32 %v190, 376
      %v238 = vadd.s32 %v190, 384
      %v239 = vadd.s32 %v190, 392
      %v240 = vadd.s32 %v190, 400
      %v241 = vadd.s32 %v190, 408
      %v242 = vadd.s32 %v190, 416
      %v243 = vadd.s32 %v190, 424
      %v244 = vadd.s32 %v190, 432
      %v245 = vadd.s32 %v190, 440
      %v246 = vadd.s32 %v190, 448
      %v247 = vadd.s32 %v190, 456
      %v248 = vadd.s32 %v190, 464
      %v249 = vadd.s32 %v190, 472
      %v250 = vadd.s32 %v190, 480
      %v251 = vadd.s32 %v190, 488
      %v252 = vadd.s32 %v190, 496
      %v253 = vadd.s32 %v190, 504
      %v254 = vadd.s32 %v190, 512
      %v255 = vadd.s32 %v190, 520
      %v256 = vadd.s32 %v190, 528
      %v257 = vadd.s32 %v190, 536
      %v258 = vadd.s32 %v190, 544
      %s259 = ssub.s32 547, %s39
      %v260 = vstv %s259
      %vm261 = vcmp.lt.s32.totalorder %v190, %v260
      %vm262 = vcmp.lt.s32.totalorder %v191, %v260
      %vm263 = vcmp.lt.s32.totalorder %v192, %v260
      %vm264 = vcmp.lt.s32.totalorder %v193, %v260
      %vm265 = vcmp.lt.s32.totalorder %v194, %v260
      %vm266 = vcmp.lt.s32.totalorder %v195, %v260
      %vm267 = vcmp.lt.s32.totalorder %v196, %v260
      %vm268 = vcmp.lt.s32.totalorder %v197, %v260
      %vm269 = vcmp.lt.s32.totalorder %v198, %v260
      %vm270 = vcmp.lt.s32.totalorder %v199, %v260
      %vm271 = vcmp.lt.s32.totalorder %v200, %v260
      %vm272 = vcmp.lt.s32.totalorder %v201, %v260
      %vm273 = vcmp.lt.s32.totalorder %v202, %v260
      %vm274 = vcmp.lt.s32.totalorder %v203, %v260
      %vm275 = vcmp.lt.s32.totalorder %v204, %v260
      %vm276 = vcmp.lt.s32.totalorder %v205, %v260
      %vm277 = vcmp.lt.s32.totalorder %v206, %v260
      %vm278 = vcmp.lt.s32.totalorder %v207, %v260
      %vm279 = vcmp.lt.s32.totalorder %v208, %v260
      %vm280 = vcmp.lt.s32.totalorder %v209, %v260
      %vm281 = vcmp.lt.s32.totalorder %v210, %v260
      %vm282 = vcmp.lt.s32.totalorder %v211, %v260
      %vm283 = vcmp.lt.s32.totalorder %v212, %v260
      %vm284 = vcmp.lt.s32.totalorder %v213, %v260
      %vm285 = vcmp.lt.s32.totalorder %v214, %v260
      %vm286 = vcmp.lt.s32.totalorder %v215, %v260
      %vm287 = vcmp.lt.s32.totalorder %v216, %v260
      %vm288 = vcmp.lt.s32.totalorder %v217, %v260
      %vm289 = vcmp.lt.s32.totalorder %v218, %v260
      %vm290 = vcmp.lt.s32.totalorder %v219, %v260
      %vm291 = vcmp.lt.s32.totalorder %v220, %v260
      %vm292 = vcmp.lt.s32.totalorder %v221, %v260
      %vm293 = vcmp.lt.s32.totalorder %v222, %v260
      %vm294 = vcmp.lt.s32.totalorder %v223, %v260
      %vm295 = vcmp.lt.s32.totalorder %v224, %v260
      %vm296 = vcmp.lt.s32.totalorder %v225, %v260
      %vm297 = vcmp.lt.s32.totalorder %v226, %v260
      %vm298 = vcmp.lt.s32.totalorder %v227, %v260
      %vm299 = vcmp.lt.s32.totalorder %v228, %v260
      %vm300 = vcmp.lt.s32.totalorder %v229, %v260
      %vm301 = vcmp.lt.s32.totalorder %v230, %v260
      %vm302 = vcmp.lt.s32.totalorder %v231, %v260
      %vm303 = vcmp.lt.s32.totalorder %v232, %v260
      %vm304 = vcmp.lt.s32.totalorder %v233, %v260
      %vm305 = vcmp.lt.s32.totalorder %v234, %v260
      %vm306 = vcmp.lt.s32.totalorder %v235, %v260
      %vm307 = vcmp.lt.s32.totalorder %v236, %v260
      %vm308 = vcmp.lt.s32.totalorder %v237, %v260
      %vm309 = vcmp.lt.s32.totalorder %v238, %v260
      %vm310 = vcmp.lt.s32.totalorder %v239, %v260
      %vm311 = vcmp.lt.s32.totalorder %v240, %v260
      %vm312 = vcmp.lt.s32.totalorder %v241, %v260
      %vm313 = vcmp.lt.s32.totalorder %v242, %v260
      %vm314 = vcmp.lt.s32.totalorder %v243, %v260
      %vm315 = vcmp.lt.s32.totalorder %v244, %v260
      %vm316 = vcmp.lt.s32.totalorder %v245, %v260
      %vm317 = vcmp.lt.s32.totalorder %v246, %v260
      %vm318 = vcmp.lt.s32.totalorder %v247, %v260
      %vm319 = vcmp.lt.s32.totalorder %v248, %v260
      %vm320 = vcmp.lt.s32.totalorder %v249, %v260
      %vm321 = vcmp.lt.s32.totalorder %v250, %v260
      %vm322 = vcmp.lt.s32.totalorder %v251, %v260
      %vm323 = vcmp.lt.s32.totalorder %v252, %v260
      %vm324 = vcmp.lt.s32.totalorder %v253, %v260
      %vm325 = vcmp.lt.s32.totalorder %v254, %v260
      %vm326 = vcmp.lt.s32.totalorder %v255, %v260
      %vm327 = vcmp.lt.s32.totalorder %v256, %v260
      %vm328 = vcmp.lt.s32.totalorder %v257, %v260
      %vm329 = vcmp.lt.s32.totalorder %v258, %v260
      %v330 = vsel %vm261, %v40, 0.0
      %v331 = vsel %vm262, %v41, 0.0
      %v332 = vsel %vm263, %v42, 0.0
      %v333 = vsel %vm264, %v43, 0.0
      %v334 = vsel %vm265, %v44, 0.0
      %v335 = vsel %vm266, %v45, 0.0
      %v336 = vsel %vm267, %v46, 0.0
      %v337 = vsel %vm268, %v47, 0.0
      %v338 = vsel %vm269, %v48, 0.0
      %v339 = vsel %vm270, %v49, 0.0
      %v340 = vsel %vm271, %v50, 0.0
      %v341 = vsel %vm272, %v51, 0.0
      %v342 = vsel %vm273, %v52, 0.0
      %v343 = vsel %vm274, %v53, 0.0
      %v344 = vsel %vm275, %v54, 0.0
      %v345 = vsel %vm276, %v55, 0.0
      %v346 = vsel %vm277, %v56, 0.0
      %v347 = vsel %vm278, %v57, 0.0
      %v348 = vsel %vm279, %v58, 0.0
      %v349 = vsel %vm280, %v59, 0.0
      %v350 = vsel %vm281, %v60, 0.0
      %v351 = vsel %vm282, %v61, 0.0
      %v352 = vsel %vm283, %v62, 0.0
      %v353 = vsel %vm284, %v63, 0.0
      %v354 = vsel %vm285, %v64, 0.0
      %v355 = vsel %vm286, %v65, 0.0
      %v356 = vsel %vm287, %v66, 0.0
      %v357 = vsel %vm288, %v67, 0.0
      %v358 = vsel %vm289, %v68, 0.0
      %v359 = vsel %vm290, %v69, 0.0
      %v360 = vsel %vm291, %v70, 0.0
      %v361 = vsel %vm292, %v71, 0.0
      %v362 = vsel %vm293, %v72, 0.0
      %v363 = vsel %vm294, %v73, 0.0
      %v364 = vsel %vm295, %v74, 0.0
      %v365 = vsel %vm296, %v75, 0.0
      %v366 = vsel %vm297, %v76, 0.0
      %v367 = vsel %vm298, %v77, 0.0
      %v368 = vsel %vm299, %v78, 0.0
      %v369 = vsel %vm300, %v79, 0.0
      %v370 = vsel %vm301, %v80, 0.0
      %v371 = vsel %vm302, %v81, 0.0
      %v372 = vsel %vm303, %v82, 0.0
      %v373 = vsel %vm304, %v83, 0.0
      %v374 = vsel %vm305, %v84, 0.0
      %v375 = vsel %vm306, %v85, 0.0
      %v376 = vsel %vm307, %v86, 0.0
      %v377 = vsel %vm308, %v87, 0.0
      %v378 = vsel %vm309, %v88, 0.0
      %v379 = vsel %vm310, %v89, 0.0
      %v380 = vsel %vm311, %v90, 0.0
      %v381 = vsel %vm312, %v91, 0.0
      %v382 = vsel %vm313, %v92, 0.0
      %v383 = vsel %vm314, %v93, 0.0
      %v384 = vsel %vm315, %v94, 0.0
      %v385 = vsel %vm316, %v95, 0.0
      %v386 = vsel %vm317, %v96, 0.0
      %v387 = vsel %vm318, %v97, 0.0
      %v388 = vsel %vm319, %v98, 0.0
      %v389 = vsel %vm320, %v99, 0.0
      %v390 = vsel %vm321, %v100, 0.0
      %v391 = vsel %vm322, %v101, 0.0
      %v392 = vsel %vm323, %v102, 0.0
      %v393 = vsel %vm324, %v103, 0.0
      %v394 = vsel %vm325, %v104, 0.0
      %v395 = vsel %vm326, %v105, 0.0
      %v396 = vsel %vm327, %v106, 0.0
      %v397 = vsel %vm328, %v107, 0.0
      %v398 = vsel %vm329, %v108, 0.0
      %v399 = vld [vmem:[#allocation5] sm:$0xff]
      %v400 = vadd.f32 %v330, %v331
      %v401 = vadd.f32 %v400, %v332
      %v402 = vadd.f32 %v401, %v333
      %v403 = vadd.f32 %v402, %v334
      %v404 = vadd.f32 %v403, %v335
      %v405 = vadd.f32 %v404, %v336
      %v406 = vadd.f32 %v405, %v337
      %v407 = vadd.f32 %v406, %v338
      %v408 = vadd.f32 %v407, %v339
      %v409 = vadd.f32 %v408, %v340
      %v410 = vadd.f32 %v409, %v341
      %v411 = vadd.f32 %v410, %v342
      %v412 = vadd.f32 %v411, %v343
      %v413 = vadd.f32 %v412, %v344
      %v414 = vadd.f32 %v413, %v345
      %v415 = vadd.f32 %v414, %v346
      %v416 = vadd.f32 %v415, %v347
      %v417 = vadd.f32 %v416, %v348
      %v418 = vadd.f32 %v417, %v349
      %v419 = vadd.f32 %v418, %v350
      %v420 = vadd.f32 %v419, %v351
      %v421 = vadd.f32 %v420, %v352
      %v422 = vadd.f32 %v421, %v353
      %v423 = vadd.f32 %v422, %v354
      %v424 = vadd.f32 %v423, %v355
      %v425 = vadd.f32 %v424, %v356
      %v426 = vadd.f32 %v425, %v357
      %v427 = vadd.f32 %v426, %v358
      %v428 = vadd.f32 %v427, %v359
      %v429 = vadd.f32 %v428, %v360
      %v430 = vadd.f32 %v429, %v361
      %v431 = vadd.f32 %v430, %v362
      %v432 = vadd.f32 %v431, %v363
      %v433 = vadd.f32 %v432, %v364
      %v434 = vadd.f32 %v433, %v365
      %v435 = vadd.f32 %v434, %v366
      %v436 = vadd.f32 %v435, %v367
      %v437 = vadd.f32 %v436, %v368
      %v438 = vadd.f32 %v437, %v369
      %v439 = vadd.f32 %v438, %v370
      %v440 = vadd.f32 %v439, %v371
      %v441 = vadd.f32 %v440, %v372
      %v442 = vadd.f32 %v441, %v373
      %v443 = vadd.f32 %v442, %v374
      %v444 = vadd.f32 %v443, %v375
      %v445 = vadd.f32 %v444, %v376
      %v446 = vadd.f32 %v445, %v377
      %v447 = vadd.f32 %v446, %v378
      %v448 = vadd.f32 %v447, %v379
      %v449 = vadd.f32 %v448, %v380
      %v450 = vadd.f32 %v449, %v381
      %v451 = vadd.f32 %v450, %v382
      %v452 = vadd.f32 %v451, %v383
      %v453 = vadd.f32 %v452, %v384
      %v454 = vadd.f32 %v453, %v385
      %v455 = vadd.f32 %v454, %v386
      %v456 = vadd.f32 %v455, %v387
      %v457 = vadd.f32 %v456, %v388
      %v458 = vadd.f32 %v457, %v389
      %v459 = vadd.f32 %v458, %v390
      %v460 = vadd.f32 %v459, %v391
      %v461 = vadd.f32 %v460, %v392
      %v462 = vadd.f32 %v461, %v393
      %v463 = vadd.f32 %v462, %v394
      %v464 = vadd.f32 %v463, %v395
      %v465 = vadd.f32 %v464, %v396
      %v466 = vadd.f32 %v465, %v397
      %v467 = vadd.f32 %v466, %v398
      %v468 = vadd.f32 %v399, %v467
      %469 = vst [vmem:[#allocation5] sm:$0xff] %v468
    $region21: #{tpu_custom_call.1} parent=1 // pred_fallthru
      _
    // Predicated region
    $region22: #{tpu_custom_call.1} parent=1 // pred_check
      _
    $region23: #{tpu_custom_call.1} parent=1 // pred_check_branch
      %471 = sbr.rel (0) target = $region25
    $region24: #{tpu_custom_call.1} parent=1 // pred_region
      %s473 = ssub.s32 128, 128
      %474 = vsyncadd [#allocation4], %s473
      %s476 = sshll.u32 [#allocation5], 4
      %s477 = int_to_ptr.vmem [resolvable:$true] %s476
      %479 = dma.vmem_to_hbm [thread:$0]  %s477, 128, %s1, [#allocation4]
    $region25: #{tpu_custom_call.1} parent=1 // pred_fallthru
      _
    // Predicated region
    $region26: #{tpu_custom_call.1} parent=1 // pred_check
      _
    $region27: #{tpu_custom_call.1} parent=1 // pred_check_branch
      %481 = sbr.rel (0) target = $region29
    $region28: #{tpu_custom_call.1} parent=1 // pred_region
      %482 = dma.done [#allocation4], 128
    $region29: #{tpu_custom_call.1} parent=1 // pred_fallthru
      _
    %483 = vsyncpa [#allocation3], 1
    %484 = vsyncpa [#allocation4], 1

</llo_original>
